<compile_context>
chip_gen: v5e
topology: v5e:2x2
jax: 0.10.0
libtpu: 0.0.40
codegen_flags: <defaults>
</compile_context>

<pallas_src>
import functools

import jax
import jax.numpy as jnp
from jax.experimental import pallas as pl
from jax.experimental.pallas import tpu as pltpu


def _scale_kernel(x_ref, o_ref, *, scale_to, divisor):
    # Cast in-kernel so the HBM read stays at the input's native width.
    x = x_ref[...].astype(jnp.float32)
    # Match torch op order exactly: multiply, true-divide, floor. Keep the
    # divide (not mul-by-reciprocal) so floor boundaries match torch when the
    # divisor is not an exact power of two; kernel is HBM-bound either way.
    o_ref[...] = jnp.floor((x * scale_to) / divisor).astype(o_ref.dtype)


def _round_up(v, m):
    return ((v + m - 1) // m) * m


def scale_layer_forward(x, in_features, scale_to, *, target_block_bytes=1 << 20):
    """x: [B, N]. Returns floor_divide(x * scale_to, sqrt(in_features // 4)) as int32."""
    B, N = x.shape
    divisor = float((in_features // 4) ** 0.5)

    in_bytes = jnp.dtype(x.dtype).itemsize
    # Sublane granularity is dtype-aware: 8 rows for f32, 16 for bf16/f16, 32 for i8.
    sublane = max(8, 32 // max(in_bytes, 1))

    # ---- Block selection (aim ~target_block_bytes per INPUT block) ---------
    full_row_bytes = N * in_bytes
    if sublane * full_row_bytes > target_block_bytes and N > 128:
        # Very wide feature axis: tile the lane axis too (multiple of 128) so
        # the pipelined in+out footprint stays small on every generation.
        tile_rows = sublane
        tile_cols = max(128, (target_block_bytes // (tile_rows * in_bytes)) // 128 * 128)
        tile_cols = min(tile_cols, _round_up(N, 128))
    else:
        # Full-extent lane axis (block == full dim, no 128-multiple needed),
        # bandwidth-sized row tile at sublane granularity.
        tile_cols = N
        rows = max(1, target_block_bytes // max(full_row_bytes, 1))
        tile_rows = max(sublane, min(_round_up(rows, sublane), _round_up(B, sublane)))

    # v7x megacore: prefer >= 4 grid steps (>= 2 per TensorCore) once there is
    # >= ~4 MiB of input, so each core overlaps prefetch/compute/writeback.
    col_steps = pl.cdiv(N, tile_cols)
    row_steps = pl.cdiv(B, tile_rows)
    if B * N * in_bytes >= (4 << 20) and row_steps * col_steps < 4:
        want_row_steps = max(1, pl.cdiv(4, col_steps))
        tile_rows = max(sublane, _round_up(pl.cdiv(B, want_row_steps), sublane))
        row_steps = pl.cdiv(B, tile_rows)

    grid = (row_steps, col_steps)
    kernel = functools.partial(_scale_kernel, scale_to=float(scale_to), divisor=divisor)

    return pl.pallas_call(
        kernel,
        out_shape=jax.ShapeDtypeStruct((B, N), jnp.int32),
        grid_spec=pltpu.PrefetchScalarGridSpec(
            num_scalar_prefetch=0,
            grid=grid,
            in_specs=[pl.BlockSpec((tile_rows, tile_cols), lambda i, j: (i, j))],
            out_specs=pl.BlockSpec((tile_rows, tile_cols), lambda i, j: (i, j)),
        ),
        compiler_params=pltpu.CompilerParams(
            dimension_semantics=("parallel", "parallel"),
        ),
    )(x)


if __name__ == "__main__":
    key = jax.random.PRNGKey(0)

    # Small deterministic example: batch=16, in_features=64, scale_to=3.0.
    B, in_features = 16, 64
    scale_to = 3.0
    # Integer-valued floats keep the floor-divide comparison exact.
    x = jax.random.randint(key, (B, in_features), minval=-50, maxval=50).astype(jnp.float32)

    out = scale_layer_forward(x, in_features, scale_to)
    out = jax.block_until_ready(out)

    # Pure-JAX reference (mirrors torch semantics; int32 instead of int64).
    divisor = float((in_features // 4) ** 0.5)
    ref = jnp.floor((x.astype(jnp.float32) * scale_to) / divisor).astype(jnp.int32)

    assert out.shape == x.shape and out.dtype == jnp.int32
    assert bool(jnp.all(out == ref)), "mismatch vs reference"
    print("KERNEL_OK")
</pallas_src>

<mosaic_0001>
module attributes {stable_mosaic.version = 11 : i64} {
  func.func @_scale_kernel(%arg0: i32, %arg1: i32, %arg2: memref<16x64xf32, #tpu.memory_space<vmem>>, %arg3: memref<16x64xi32, #tpu.memory_space<vmem>>) attributes {dimension_semantics = [#tpu.dimension_semantics<parallel>, #tpu.dimension_semantics<parallel>], iteration_bounds = array<i64: 1, 1>, scalar_prefetch = 0 : i64, scratch_operands = 0 : i64, tpu.core_type = #tpu.core_type<tc>, window_params = [{transform_indices = @transform_0, window_bounds = array<i64: 16, 64>}, {transform_indices = @transform_1, window_bounds = array<i64: 16, 64>}]} {
    %c0 = arith.constant 0 : index
    %c0_0 = arith.constant 0 : index
    %0 = vector.load %arg2[%c0, %c0_0] : memref<16x64xf32, #tpu.memory_space<vmem>>, vector<16x64xf32>
    %cst = arith.constant 3.000000e+00 : f32
    %1 = vector.broadcast %cst : f32 to vector<16x64xf32>
    %2 = arith.mulf %0, %1 : vector<16x64xf32>
    %cst_1 = arith.constant 4.000000e+00 : f32
    %3 = vector.broadcast %cst_1 : f32 to vector<16x64xf32>
    %4 = arith.divf %2, %3 : vector<16x64xf32>
    %5 = math.floor %4 : vector<16x64xf32>
    %6 = arith.fptosi %5 : vector<16x64xf32> to vector<16x64xi32>
    %c0_2 = arith.constant 0 : index
    %c0_3 = arith.constant 0 : index
    %7 = vector.load %arg3[%c0_2, %c0_3] : memref<16x64xi32, #tpu.memory_space<vmem>>, vector<16x64xi32>
    tpu.vector_store %arg3[%c0_2, %c0_3], %6 {strides = array<i32>} : memref<16x64xi32, #tpu.memory_space<vmem>>, vector<16x64xi32>,
    return
  }
  func.func @transform_0(%arg0: i32, %arg1: i32) -> (i32, i32) {
    %c0_i32 = arith.constant 0 : i32
    return %arg0, %arg1 : i32, i32
  }
  func.func @transform_1(%arg0: i32, %arg1: i32) -> (i32, i32) {
    %c0_i32 = arith.constant 0 : i32
    return %arg0, %arg1 : i32, i32
  }
}

</mosaic_0001>

<llo_original>
// kernel: tpu_custom_call.1
$region0: #{tpu_custom_call.1}
  #allocation0 [shape = 'u32[]', space=smem, size = 0x4, offset = 0x4, fixed_abs, tag = 'smem constant byte address 0x4 - core index']
  #allocation1 [shape = 'u32[72,128]{1,0:T(1,128)}', space=vmem, size = 0x9000, scoped, tag = 'internal scratch']
  %s0 = inlined_call_operand.hbm [shape: f32[16,64], index: 0, kind: input, shape index: {}]
  %s1 = inlined_call_operand.hbm [shape: s32[16,64], index: 1, kind: output, shape index: {}]
  %s2 = sld [smem:[#allocation0]]
  $region18: #{tpu_custom_call.1} parent=0
    _
  %s4 = ssub.s32 1, %s2
  %s5 = scalar_select 0, %s4, %s2
  $region1: #{tpu_custom_call.1} parent=0
    #allocation2 [shape = 'u8[8192]{0}', space=vmem, size = 0x2000, scoped, tag = 'input window, operand 0, single buffered']
    #allocation3 [shape = 's32[1]{0}', space=sflag, size = 0x4, scoped, tag = 'scoped memory for tpu_custom_call.1']
    #allocation4 [shape = 's32[1]{0}', space=sflag, size = 0x4, scoped, tag = 'scoped memory for tpu_custom_call.1']
    #allocation5 [shape = 'u8[8192]{0}', space=vmem, size = 0x2000, scoped, tag = 'output window, operand 0, single buffered']
    %6 = vsyncpa [#allocation3], 0
    %7 = vsyncpa [#allocation4], 0
    // Predicated region
    $region2: #{tpu_custom_call.1} parent=1 // pred_check
      _
    $region3: #{tpu_custom_call.1} parent=1 // pred_check_branch
      %9 = sbr.rel (0) target = $region5
    $region4: #{tpu_custom_call.1} parent=1 // pred_region
      %11 = vsyncadd [#allocation3], 0
      %s12 = sshll.u32 %s0, 4
      %s13 = int_to_ptr.hbm [resolvable:$true] %s12
      %s14 = sshll.u32 [#allocation2], 4
      %s15 = int_to_ptr.vmem [resolvable:$true] %s14
      %20 = dma.hbm_to_vmem [thread:$0]  %s13, 256, %s15, [#allocation3], 128, 128, 8
    $region5: #{tpu_custom_call.1} parent=1 // pred_fallthru
      _
    // Predicated region
    $region6: #{tpu_custom_call.1} parent=1 // pred_check
      _
    $region7: #{tpu_custom_call.1} parent=1 // pred_check_branch
      %22 = sbr.rel (0) target = $region9
    $region8: #{tpu_custom_call.1} parent=1 // pred_region
      %24 = dma.done [#allocation3], 256
    $region9: #{tpu_custom_call.1} parent=1 // pred_fallthru
      _
    %v25 = vld [vmem:[#allocation2] sm:$0xff]
    %v26 = vld [vmem:[#allocation2 + $0x8] sm:$0xff]
    %v27 = vmul.f32 %v25, 3.0
    %v28 = vmul.f32 %v26, 3.0
    %v29 = vrcp.pop 4.0
    %v30 = vmul.f32 4.0, %v29
    %v31 = vsub.f32 1.0, %v30
    %v32 = vmul.f32 %v29, %v31
    %v33 = vadd.f32 %v29, %v32
    %vm34 = vweird.f32 %v29
    %v35 = vsel %vm34, %v29, %v33
    %v36 = vmul.f32 %v27, %v35
    %v37 = vmul.f32 %v28, %v35
    %v38 = vfloor.f32 %v36
    %v39 = vfloor.f32 %v37
    %v40 = vcvt.f32.s32.to.zero.pseudo %v38
    %v41 = vcvt.f32.s32.to.zero.pseudo %v39
    %vm42 = vcmask 523264
    %43 = vst.msk [vmem:[#allocation5] sm:$0xff] %vm42, %v40
    %44 = vst.msk [vmem:[#allocation5 + $0x8] sm:$0xff] %vm42, %v41
    // Predicated region
    $region10: #{tpu_custom_call.1} parent=1 // pred_check
      _
    $region11: #{tpu_custom_call.1} parent=1 // pred_check_branch
      %46 = sbr.rel (0) target = $region13
    $region12: #{tpu_custom_call.1} parent=1 // pred_region
      %48 = vsyncadd [#allocation4], 0
      %s49 = sshll.u32 [#allocation5], 4
      %s50 = int_to_ptr.vmem [resolvable:$true] %s49
      %s51 = sshll.u32 %s1, 4
      %s52 = int_to_ptr.hbm [resolvable:$true] %s51
      %57 = dma.vmem_to_hbm [thread:$0]  %s50, 256, %s52, [#allocation4], 128, 128, 8
    $region13: #{tpu_custom_call.1} parent=1 // pred_fallthru
      _
    // Predicated region
    $region14: #{tpu_custom_call.1} parent=1 // pred_check
      _
    $region15: #{tpu_custom_call.1} parent=1 // pred_check_branch
      %59 = sbr.rel (0) target = $region17
    $region16: #{tpu_custom_call.1} parent=1 // pred_region
      %61 = dma.done [#allocation4], 256
    $region17: #{tpu_custom_call.1} parent=1 // pred_fallthru
      _
    %62 = vsyncpa [#allocation3], 1
    %63 = vsyncpa [#allocation4], 1

</llo_original>
